<compile_context>
chip_gen: v7x
topology: tpu7x:2x2x1
jax: 0.10.0
libtpu: 0.0.40
codegen_flags: <defaults>
</compile_context>

<pallas_src>
import jax
import jax.numpy as jnp
from jax.experimental import pallas as pl
from jax.experimental.pallas import tpu as pltpu


def fasternet_kernel(xcat_ref, res_ref, wexp_ref, w2_ref, shift_ref, o_ref):
    # xcat: (9*Cc+Cc, B*HW) bf16   res: (C, B*HW) f32
    # wexp: (Ce, 9*Cc+Cc) bf16     w2:  (C, Ce) bf16     shift: (Ce, 1) f32
    # Fused PConv3x3 + 1x1 expand (BN scale pre-folded): one MXU dot.
    h = jnp.dot(wexp_ref[...], xcat_ref[...],
                preferred_element_type=jnp.float32)
    # BN shift + ReLU (f32 elementwise).
    h = jnp.maximum(h + shift_ref[...], 0.0)
    # 1x1 project + residual add.
    out = jnp.dot(w2_ref[...], h.astype(jnp.bfloat16),
                  preferred_element_type=jnp.float32)
    o_ref[...] = res_ref[...] + out


def eca_indices(x_nchw, eca_w):
    """Eca_layer channel ordering (tiny (B, C) glue, plain JAX)."""
    y = jnp.mean(x_nchw, axis=(2, 3))                  # AdaptiveAvgPool2d(1)
    yp = jnp.pad(y, ((0, 0), (1, 1)))                  # Conv1d(1,1,k=3,pad=1,no bias)
    yc = eca_w[0] * yp[:, :-2] + eca_w[1] * yp[:, 1:-1] + eca_w[2] * yp[:, 2:]
    # sigmoid is monotonic, so sorting yc directly == sorting sigmoid(yc).
    # TODO(synk): torch.topk tie-breaking on exactly-equal scores is
    # unspecified; jnp.argsort is stable (matters only on exact ties).
    return jnp.argsort(-yc, axis=1)                    # (B, C), descending


def fasternet_block2_1(x_nchw, params):
    B, C, H, W = x_nchw.shape
    Cc = C // 2
    HW = H * W
    N = B * HW
    Ce = params['w2'].shape[1]
    K = 9 * Cc + Cc                                    # fused contraction dim

    idx = eca_indices(x_nchw, params['eca_w'])         # (B, C)

    # Channels-major, batch folded into lanes: (C, B, H, W).
    # TODO(synk): the ECA channel gather stays an XLA gather here; an in-kernel
    # sublane gather via scalar-prefetched indices would remove this pass.
    x_t = jnp.transpose(x_nchw, (1, 0, 2, 3))
    x_perm = jnp.take_along_axis(
        x_t, jnp.transpose(idx)[:, :, None, None], axis=0)

    # im2col patches for the 3x3 PConv (pad=1), channels-major.
    # TODO(synk): still built with XLA pad/slice/concat in the wrapper; an
    # in-kernel roll/mask im2col would fuse it into the pallas_call.
    x1p = jnp.pad(x_perm[:Cc], ((0, 0), (0, 0), (1, 1), (1, 1)))
    patches = jnp.concatenate(
        [x1p[:, :, ky:ky + H, kx:kx + W] for ky in range(3) for kx in range(3)],
        axis=0)                                        # (9*Cc, B, H, W)
    xcat = jnp.concatenate(
        [patches.reshape(9 * Cc, N), x_perm[Cc:].reshape(Cc, N)],
        axis=0).astype(jnp.bfloat16)                   # (K, B*HW)
    res = x_t.reshape(C, N)                            # residual stays f32

    out = pl.pallas_call(
        fasternet_kernel,
        out_shape=jax.ShapeDtypeStruct((C, N), jnp.float32),
        grid=(1,),
        in_specs=[
            pl.BlockSpec((K, N), lambda i: (0, 0)),
            pl.BlockSpec((C, N), lambda i: (0, 0)),
            pl.BlockSpec((Ce, K), lambda i: (0, 0)),
            pl.BlockSpec((C, Ce), lambda i: (0, 0)),
            pl.BlockSpec((Ce, 1), lambda i: (0, 0)),
        ],
        out_specs=pl.BlockSpec((C, N), lambda i: (0, 0)),
        input_output_aliases={1: 0},                   # donate residual buffer
        compiler_params=pltpu.CompilerParams(
            dimension_semantics=("arbitrary",)),
    )(xcat, res, params['w_exp'], params['w2'], params['shift'])

    return jnp.transpose(out.reshape(C, B, H, W), (1, 0, 2, 3))


def init_params(key, dim=40, expand_ratio=2):
    """Deterministic synthetic parameters (shapes follow the PyTorch module)."""
    Cc = dim // 2
    Ce = int(dim * expand_ratio)
    ks = jax.random.split(key, 6)
    # torch layouts: conv3x3 (out,in,kh,kw); 1x1 convs (out,in); conv1d (1,1,3)
    w3_t = 0.1 * jax.random.normal(ks[0], (Cc, Cc, 3, 3), jnp.float32)
    w1_t = 0.1 * jax.random.normal(ks[1], (Ce, dim), jnp.float32)
    w2_t = 0.1 * jax.random.normal(ks[2], (dim, Ce), jnp.float32)
    eca_w = 0.5 * jax.random.normal(ks[3], (3,), jnp.float32)
    gamma = 1.0 + 0.1 * jax.random.normal(ks[4], (Ce,), jnp.float32)
    beta = 0.1 * jax.random.normal(ks[5], (Ce,), jnp.float32)
    running_mean = jnp.zeros((Ce,), jnp.float32)
    running_var = jnp.ones((Ce,), jnp.float32)
    eps = 1e-5
    scale = gamma / jnp.sqrt(running_var + eps)        # BN (eval) folded
    shift = beta - running_mean * scale

    # (out,in,kh,kw) -> (out,kh,kw,in) -> (out, 9*in): matches the patch order.
    w3col = jnp.transpose(w3_t, (0, 2, 3, 1)).reshape(Cc, 9 * Cc)
    w1_scaled = w1_t * scale[:, None]                  # fold BN scale into conv1
    # Fold PConv3x3 into the expand weight (all in f32, cast once to bf16):
    # h = w1a_scaled @ (w3col @ patches) + w1b_scaled @ x2 = W_exp @ [patches;x2]
    w_exp = jnp.concatenate(
        [w1_scaled[:, :Cc] @ w3col, w1_scaled[:, Cc:]], axis=1)   # (Ce, 9Cc+Cc)
    return dict(
        w_exp=w_exp.astype(jnp.bfloat16),
        w2=w2_t.astype(jnp.bfloat16),
        shift=shift[:, None],                          # (Ce, 1), f32
        eca_w=eca_w,
        # f32 originals for the pure-JAX reference
        w3_t=w3_t, w1_t=w1_t, w2_t=w2_t, scale=scale, shift_vec=shift)


def reference(x_nchw, params):
    """Pure-JAX f32 reference of the same forward pass (correctness check)."""
    B, C, H, W = x_nchw.shape
    Cc = C // 2
    idx = eca_indices(x_nchw, params['eca_w'])
    x = jnp.take_along_axis(x_nchw, idx[:, :, None, None], axis=1)
    x1, x2 = x[:, :Cc], x[:, Cc:]
    y1 = jax.lax.conv_general_dilated(
        x1, params['w3_t'], window_strides=(1, 1), padding='SAME',
        dimension_numbers=('NCHW', 'OIHW', 'NCHW'))
    xc = jnp.concatenate([y1, x2], axis=1)
    h = jnp.einsum('oc,bchw->bohw', params['w1_t'], xc)
    h = h * params['scale'][None, :, None, None] \
        + params['shift_vec'][None, :, None, None]
    h = jnp.maximum(h, 0.0)
    out = jnp.einsum('oc,bchw->bohw', params['w2_t'], h)
    return x_nchw + out


if __name__ == "__main__":
    key = jax.random.PRNGKey(0)
    kx, kp = jax.random.split(key)
    B, dim, H, W = 2, 40, 16, 16                       # module default dim=40
    x = jax.random.normal(kx, (B, dim, H, W), jnp.float32)
    params = init_params(kp, dim=dim, expand_ratio=2)

    y = jax.jit(fasternet_block2_1)(x, params)
    y = jax.block_until_ready(y)

    y_ref = reference(x, params)
    max_err = float(jnp.max(jnp.abs(y - y_ref)))
    assert y.shape == (B, dim, H, W)
    # bf16 matmul operands (f32 accumulation) vs. the pure-f32 reference.
    assert jnp.allclose(y, y_ref, atol=5e-2, rtol=5e-2), max_err
    print("KERNEL_OK")
</pallas_src>

<mosaic_0001>
module attributes {stable_mosaic.version = 11 : i64} {
  func.func @fasternet_kernel(%arg0: i32, %arg1: memref<200x512xbf16, #tpu.memory_space<vmem>>, %arg2: memref<40x512xf32, #tpu.memory_space<vmem>>, %arg3: memref<80x200xbf16, #tpu.memory_space<vmem>>, %arg4: memref<40x80xbf16, #tpu.memory_space<vmem>>, %arg5: memref<80x1xf32, #tpu.memory_space<vmem>>, %arg6: memref<40x512xf32, #tpu.memory_space<vmem>>) attributes {dimension_semantics = [#tpu.dimension_semantics<arbitrary>], iteration_bounds = array<i64: 1>, scalar_prefetch = 0 : i64, scratch_operands = 0 : i64, tpu.core_type = #tpu.core_type<tc>, window_params = [{pipeline_mode = #tpu.pipeline_mode<synchronous>, transform_indices = @transform_0, window_bounds = array<i64: 200, 512>}, {pipeline_mode = #tpu.pipeline_mode<synchronous>, transform_indices = @transform_1, window_bounds = array<i64: 40, 512>}, {pipeline_mode = #tpu.pipeline_mode<synchronous>, transform_indices = @transform_2, window_bounds = array<i64: 80, 200>}, {pipeline_mode = #tpu.pipeline_mode<synchronous>, transform_indices = @transform_3, window_bounds = array<i64: 40, 80>}, {pipeline_mode = #tpu.pipeline_mode<synchronous>, transform_indices = @transform_4, window_bounds = array<i64: 80, 1>}, {pipeline_mode = #tpu.pipeline_mode<synchronous>, transform_indices = @transform_5, window_bounds = array<i64: 40, 512>}]} {
    %c0 = arith.constant 0 : index
    %c0_0 = arith.constant 0 : index
    %0 = vector.load %arg3[%c0, %c0_0] : memref<80x200xbf16, #tpu.memory_space<vmem>>, vector<80x200xbf16>
    %c0_1 = arith.constant 0 : index
    %c0_2 = arith.constant 0 : index
    %1 = vector.load %arg1[%c0_1, %c0_2] : memref<200x512xbf16, #tpu.memory_space<vmem>>, vector<200x512xbf16>
    %cst = arith.constant dense<0.000000e+00> : vector<80x512xf32>
    %2 = tpu.matmul %0, %1, %cst {dimension_numbers = #tpu.dot_dimension_numbers<[1], [0], [0], [1], [0, 0, 1, 1], [], []>} : vector<80x200xbf16>, vector<200x512xbf16>, vector<80x512xf32> -> vector<80x512xf32>
    %c0_3 = arith.constant 0 : index
    %c0_4 = arith.constant 0 : index
    %3 = vector.load %arg5[%c0_3, %c0_4] : memref<80x1xf32, #tpu.memory_space<vmem>>, vector<80x1xf32>
    %4 = vector.broadcast %3 : vector<80x1xf32> to vector<80x512xf32>
    %5 = arith.addf %2, %4 : vector<80x512xf32>
    %cst_5 = arith.constant 0.000000e+00 : f32
    %6 = vector.broadcast %cst_5 : f32 to vector<80x512xf32>
    %7 = arith.maximumf %5, %6 : vector<80x512xf32>
    %c0_6 = arith.constant 0 : index
    %c0_7 = arith.constant 0 : index
    %8 = vector.load %arg4[%c0_6, %c0_7] : memref<40x80xbf16, #tpu.memory_space<vmem>>, vector<40x80xbf16>
    %9 = arith.truncf %7 : vector<80x512xf32> to vector<80x512xbf16>
    %cst_8 = arith.constant dense<0.000000e+00> : vector<40x512xf32>
    %10 = tpu.matmul %8, %9, %cst_8 {dimension_numbers = #tpu.dot_dimension_numbers<[1], [0], [0], [1], [0, 0, 1, 1], [], []>} : vector<40x80xbf16>, vector<80x512xbf16>, vector<40x512xf32> -> vector<40x512xf32>
    %c0_9 = arith.constant 0 : index
    %c0_10 = arith.constant 0 : index
    %11 = vector.load %arg2[%c0_9, %c0_10] : memref<40x512xf32, #tpu.memory_space<vmem>>, vector<40x512xf32>
    %12 = arith.addf %11, %10 : vector<40x512xf32>
    %c0_11 = arith.constant 0 : index
    %c0_12 = arith.constant 0 : index
    %13 = vector.load %arg6[%c0_11, %c0_12] : memref<40x512xf32, #tpu.memory_space<vmem>>, vector<40x512xf32>
    tpu.vector_store %arg6[%c0_11, %c0_12], %12 {strides = array<i32>} : memref<40x512xf32, #tpu.memory_space<vmem>>, vector<40x512xf32>,
    return
  }
  func.func @transform_0(%arg0: i32) -> (i32, i32) {
    %c0_i32 = arith.constant 0 : i32
    %c0_i32_0 = arith.constant 0 : i32
    %c0_i32_1 = arith.constant 0 : i32
    return %c0_i32, %c0_i32_0 : i32, i32
  }
  func.func @transform_1(%arg0: i32) -> (i32, i32) {
    %c0_i32 = arith.constant 0 : i32
    %c0_i32_0 = arith.constant 0 : i32
    %c0_i32_1 = arith.constant 0 : i32
    return %c0_i32, %c0_i32_0 : i32, i32
  }
  func.func @transform_2(%arg0: i32) -> (i32, i32) {
    %c0_i32 = arith.constant 0 : i32
    %c0_i32_0 = arith.constant 0 : i32
    %c0_i32_1 = arith.constant 0 : i32
    return %c0_i32, %c0_i32_0 : i32, i32
  }
  func.func @transform_3(%arg0: i32) -> (i32, i32) {
    %c0_i32 = arith.constant 0 : i32
    %c0_i32_0 = arith.constant 0 : i32
    %c0_i32_1 = arith.constant 0 : i32
    return %c0_i32, %c0_i32_0 : i32, i32
  }
  func.func @transform_4(%arg0: i32) -> (i32, i32) {
    %c0_i32 = arith.constant 0 : i32
    %c0_i32_0 = arith.constant 0 : i32
    %c0_i32_1 = arith.constant 0 : i32
    return %c0_i32, %c0_i32_0 : i32, i32
  }
  func.func @transform_5(%arg0: i32) -> (i32, i32) {
    %c0_i32 = arith.constant 0 : i32
    %c0_i32_0 = arith.constant 0 : i32
    %c0_i32_1 = arith.constant 0 : i32
    return %c0_i32, %c0_i32_0 : i32, i32
  }
}

</mosaic_0001>

<llo_original>
// kernel: fasternet_block2_1.1
$region0: #{fasternet_block2_1.1}
  #allocation0 [shape = 'u32[]', space=smem, size = 0x4, offset = 0x4, fixed_abs, tag = 'smem constant byte address 0x4 - core index']
  #allocation1 [shape = 'u32[144,128]{1,0:T(1,128)}', space=vmem, size = 0x12000, scoped, tag = 'internal scratch']
  %s0 = inlined_call_operand.vmem [shape: bf16[200,512], index: 0, kind: input, shape index: {}]
  %s1 = inlined_call_operand.vmem [shape: f32[40,512], index: 1, kind: input, shape index: {}, may-alias: {1,5}]
  %s2 = inlined_call_operand.vmem [shape: bf16[80,200], index: 2, kind: input, shape index: {}]
  %s3 = inlined_call_operand.vmem [shape: bf16[40,80], index: 3, kind: input, shape index: {}]
  %s4 = inlined_call_operand.vmem [shape: f32[80,1], index: 4, kind: input, shape index: {}]
  %s5 = inlined_call_operand.vmem [shape: f32[40,512], index: 5, kind: output, shape index: {}, may-alias: {1,5}]
  %s6 = sld [smem:[#allocation0]]
  $region30: #{fasternet_block2_1.1} parent=0
    _
  %s8 = ssub.s32 1, %s6
  %s9 = scalar_select 0, %s8, %s6
  // Predicated region
  $region2: #{fasternet_block2_1.1} parent=0 // pred_check
    _
  $region3: #{fasternet_block2_1.1} parent=0 // pred_check_branch
    %11 = sbr.rel (0) target = $region5
  $region4: #{fasternet_block2_1.1} parent=0 // pred_region
    _
  $region5: #{fasternet_block2_1.1} parent=0 // pred_fallthru
    _
  // Predicated region
  $region6: #{fasternet_block2_1.1} parent=0 // pred_check
    _
  $region7: #{fasternet_block2_1.1} parent=0 // pred_check_branch
    %13 = sbr.rel (0) target = $region9
  $region8: #{fasternet_block2_1.1} parent=0 // pred_region
    _
  $region9: #{fasternet_block2_1.1} parent=0 // pred_fallthru
    _
  // Predicated region
  $region10: #{fasternet_block2_1.1} parent=0 // pred_check
    _
  $region11: #{fasternet_block2_1.1} parent=0 // pred_check_branch
    %15 = sbr.rel (0) target = $region13
  $region12: #{fasternet_block2_1.1} parent=0 // pred_region
    _
  $region13: #{fasternet_block2_1.1} parent=0 // pred_fallthru
    _
  // Predicated region
  $region14: #{fasternet_block2_1.1} parent=0 // pred_check
    _
  $region15: #{fasternet_block2_1.1} parent=0 // pred_check_branch
    %17 = sbr.rel (0) target = $region17
  $region16: #{fasternet_block2_1.1} parent=0 // pred_region
    _
  $region17: #{fasternet_block2_1.1} parent=0 // pred_fallthru
    _
  // Predicated region
  $region18: #{fasternet_block2_1.1} parent=0 // pred_check
    _
  $region19: #{fasternet_block2_1.1} parent=0 // pred_check_branch
    %19 = sbr.rel (0) target = $region21
  $region20: #{fasternet_block2_1.1} parent=0 // pred_region
    _
  $region21: #{fasternet_block2_1.1} parent=0 // pred_fallthru
    _
  %v21 = vld [vmem:[%s2] sm:$0xff]
  %v22 = vld [vmem:[%s2 + $0x8] sm:$0xff]
  %v23 = vld [vmem:[%s2 + $0x10] sm:$0xff]
  %v24 = vld [vmem:[%s2 + $0x18] sm:$0xff]
  %v25 = vld [vmem:[%s2 + $0x20] sm:$0xff]
  %v26 = vld [vmem:[%s2 + $0x28] sm:$0xff]
  %v27 = vld [vmem:[%s2 + $0x30] sm:$0xff]
  %v28 = vld [vmem:[%s2 + $0x38] sm:$0xff]
  %v29 = vld [vmem:[%s2 + $0x40] sm:$0xff]
  %v30 = vld [vmem:[%s2 + $0x48] sm:$0xff]
  %v31 = vld [vmem:[%s0] sm:$0xff]
  %v32 = vld [vmem:[%s0 + $0x8] sm:$0xff]
  %v33 = vld [vmem:[%s0 + $0x10] sm:$0xff]
  %v34 = vld [vmem:[%s0 + $0x18] sm:$0xff]
  %v35 = vld [vmem:[%s0 + $0x20] sm:$0xff]
  %v36 = vld [vmem:[%s0 + $0x28] sm:$0xff]
  %v37 = vld [vmem:[%s0 + $0x30] sm:$0xff]
  %v38 = vld [vmem:[%s0 + $0x38] sm:$0xff]
  %v39 = vld [vmem:[%s0 + $0x40] sm:$0xff]
  %v40 = vld [vmem:[%s0 + $0x48] sm:$0xff]
  %v41 = vld [vmem:[%s0 + $0x50] sm:$0xff]
  %v42 = vld [vmem:[%s0 + $0x58] sm:$0xff]
  %v43 = vld [vmem:[%s0 + $0x60] sm:$0xff]
  %v44 = vld [vmem:[%s0 + $0x68] sm:$0xff]
  %v45 = vld [vmem:[%s0 + $0x70] sm:$0xff]
  %v46 = vld [vmem:[%s0 + $0x78] sm:$0xff]
  %v47 = vld [vmem:[%s0 + $0x80] sm:$0xff]
  %v48 = vld [vmem:[%s0 + $0x88] sm:$0xff]
  %v49 = vld [vmem:[%s0 + $0x90] sm:$0xff]
  %v50 = vld [vmem:[%s0 + $0x98] sm:$0xff]
  %v51 = vld [vmem:[%s0 + $0xa0] sm:$0xff]
  %v52 = vld [vmem:[%s0 + $0xa8] sm:$0xff]
  %v53 = vld [vmem:[%s0 + $0xb0] sm:$0xff]
  %v54 = vld [vmem:[%s0 + $0xb8] sm:$0xff]
  %v55 = vld [vmem:[%s0 + $0xc0] sm:$0xff]
  %v56 = vld [vmem:[%s0 + $0xc8] sm:$0xff]
  %v57 = vld [vmem:[%s0 + $0xd0] sm:$0xff]
  %v58 = vld [vmem:[%s0 + $0xd8] sm:$0xff]
  %v59 = vld [vmem:[%s0 + $0xe0] sm:$0xff]
  %v60 = vld [vmem:[%s0 + $0xe8] sm:$0xff]
  %v61 = vld [vmem:[%s0 + $0xf0] sm:$0xff]
  %v62 = vld [vmem:[%s0 + $0xf8] sm:$0xff]
  %v63 = vld [vmem:[%s0 + $0x100] sm:$0xff]
  %v64 = vld [vmem:[%s0 + $0x108] sm:$0xff]
  %v65 = vld [vmem:[%s0 + $0x110] sm:$0xff]
  %v66 = vld [vmem:[%s0 + $0x118] sm:$0xff]
  %v67 = vld [vmem:[%s0 + $0x120] sm:$0xff]
  %v68 = vld [vmem:[%s0 + $0x128] sm:$0xff]
  %v69 = vld [vmem:[%s0 + $0x130] sm:$0xff]
  %v70 = vld [vmem:[%s0 + $0x138] sm:$0xff]
  %v71 = vld [vmem:[%s0 + $0x140] sm:$0xff]
  %v72 = vld [vmem:[%s0 + $0x148] sm:$0xff]
  %v73 = vld [vmem:[%s0 + $0x150] sm:$0xff]
  %v74 = vld [vmem:[%s0 + $0x158] sm:$0xff]
  %v75 = vld [vmem:[%s0 + $0x160] sm:$0xff]
  %v76 = vld [vmem:[%s0 + $0x168] sm:$0xff]
  %v77 = vld [vmem:[%s0 + $0x170] sm:$0xff]
  %v78 = vld [vmem:[%s0 + $0x178] sm:$0xff]
  %v79 = vld [vmem:[%s0 + $0x180] sm:$0xff]
  %v80 = vld [vmem:[%s0 + $0x188] sm:$0xff]
  %v81 = vld [vmem:[%s4] sm:$0xff]
  %v82 = vld [vmem:[%s4 + $0x8] sm:$0xff]
  %v83 = vld [vmem:[%s4 + $0x10] sm:$0xff]
  %v84 = vld [vmem:[%s4 + $0x18] sm:$0xff]
  %v85 = vld [vmem:[%s4 + $0x20] sm:$0xff]
  %v86 = vld [vmem:[%s4 + $0x28] sm:$0xff]
  %v87 = vld [vmem:[%s4 + $0x30] sm:$0xff]
  %v88 = vld [vmem:[%s4 + $0x38] sm:$0xff]
  %v89 = vld [vmem:[%s4 + $0x40] sm:$0xff]
  %v90 = vld [vmem:[%s4 + $0x48] sm:$0xff]
  %92 = vset.pattern.permute.xlu0 0
  %93 = vperm.xlu0 %92, %v81
  %v94 = vpop.permute.xlu0 %93
  %97 = vset.pattern.permute.xlu0 0
  %98 = vperm.xlu0 %97, %v82
  %v99 = vpop.permute.xlu0 %98
  %102 = vset.pattern.permute.xlu0 0
  %103 = vperm.xlu0 %102, %v83
  %v104 = vpop.permute.xlu0 %103
  %107 = vset.pattern.permute.xlu0 0
  %108 = vperm.xlu0 %107, %v84
  %v109 = vpop.permute.xlu0 %108
  %112 = vset.pattern.permute.xlu0 0
  %113 = vperm.xlu0 %112, %v85
  %v114 = vpop.permute.xlu0 %113
  %117 = vset.pattern.permute.xlu0 0
  %118 = vperm.xlu0 %117, %v86
  %v119 = vpop.permute.xlu0 %118
  %122 = vset.pattern.permute.xlu0 0
  %123 = vperm.xlu0 %122, %v87
  %v124 = vpop.permute.xlu0 %123
  %127 = vset.pattern.permute.xlu0 0
  %128 = vperm.xlu0 %127, %v88
  %v129 = vpop.permute.xlu0 %128
  %132 = vset.pattern.permute.xlu0 0
  %133 = vperm.xlu0 %132, %v89
  %v134 = vpop.permute.xlu0 %133
  %137 = vset.pattern.permute.xlu0 0
  %138 = vperm.xlu0 %137, %v90
  %v139 = vpop.permute.xlu0 %138
  %v151 = vunpack.c.l.b16 %v21
  %v152 = vunpack.c.h.b16 %v21
  %v153 = vunpack.c.l.b16 %v22
  %v154 = vunpack.c.h.b16 %v22
  %v155 = vunpack.c.l.b16 %v23
  %v156 = vunpack.c.h.b16 %v23
  %v157 = vunpack.c.l.b16 %v24
  %v158 = vunpack.c.h.b16 %v24
  %v159 = vunpack.c.l.b16 %v25
  %v160 = vunpack.c.h.b16 %v25
  %v161 = vunpack.c.l.b16 %v26
  %v162 = vunpack.c.h.b16 %v26
  %v163 = vunpack.c.l.b16 %v27
  %v164 = vunpack.c.h.b16 %v27
  %v165 = vunpack.c.l.b16 %v28
  %v166 = vunpack.c.h.b16 %v28
  %v167 = vunpack.c.l.b16 %v29
  %v168 = vunpack.c.h.b16 %v29
  %v169 = vunpack.c.l.b16 %v30
  %v170 = vunpack.c.h.b16 %v30
  %v171 = vpack.c.b16 %v153, %v151
  %v172 = vpack.c.b16 %v154, %v152
  %v173 = vpack.c.b16 %v157, %v155
  %v174 = vpack.c.b16 %v158, %v156
  %v175 = vpack.c.b16 %v161, %v159
  %v176 = vpack.c.b16 %v162, %v160
  %v177 = vpack.c.b16 %v165, %v163
  %v178 = vpack.c.b16 %v166, %v164
  %v179 = vpack.c.b16 %v169, %v167
  %v180 = vpack.c.b16 %v170, %v168
  %v236 = vunpack.c.l.b16 %v31
  %v237 = vunpack.c.h.b16 %v31
  %v238 = vunpack.c.l.b16 %v32
  %v239 = vunpack.c.h.b16 %v32
  %v240 = vunpack.c.l.b16 %v33
  %v241 = vunpack.c.h.b16 %v33
  %v242 = vunpack.c.l.b16 %v34
  %v243 = vunpack.c.h.b16 %v34
  %v244 = vunpack.c.l.b16 %v35
  %v245 = vunpack.c.h.b16 %v35
  %v246 = vunpack.c.l.b16 %v36
  %v247 = vunpack.c.h.b16 %v36
  %v248 = vunpack.c.l.b16 %v37
  %v249 = vunpack.c.h.b16 %v37
  %v250 = vunpack.c.l.b16 %v38
  %v251 = vunpack.c.h.b16 %v38
  %v252 = vunpack.c.l.b16 %v39
  %v253 = vunpack.c.h.b16 %v39
  %v254 = vunpack.c.l.b16 %v40
  %v255 = vunpack.c.h.b16 %v40
  %v256 = vunpack.c.l.b16 %v41
  %v257 = vunpack.c.h.b16 %v41
  %v258 = vunpack.c.l.b16 %v42
  %v259 = vunpack.c.h.b16 %v42
  %v260 = vunpack.c.l.b16 %v43
  %v261 = vunpack.c.h.b16 %v43
  %v262 = vunpack.c.l.b16 %v44
  %v263 = vunpack.c.h.b16 %v44
  %v264 = vunpack.c.l.b16 %v45
  %v265 = vunpack.c.h.b16 %v45
  %v266 = vunpack.c.l.b16 %v46
  %v267 = vunpack.c.h.b16 %v46
  %v268 = vunpack.c.l.b16 %v47
  %v269 = vunpack.c.h.b16 %v47
  %v270 = vunpack.c.l.b16 %v48
  %v271 = vunpack.c.h.b16 %v48
  %v272 = vunpack.c.l.b16 %v49
  %v273 = vunpack.c.h.b16 %v49
  %v274 = vunpack.c.l.b16 %v50
  %v275 = vunpack.c.h.b16 %v50
  %v276 = vunpack.c.l.b16 %v51
  %v277 = vunpack.c.h.b16 %v51
  %v278 = vunpack.c.l.b16 %v52
  %v279 = vunpack.c.h.b16 %v52
  %v280 = vunpack.c.l.b16 %v53
  %v281 = vunpack.c.h.b16 %v53
  %v282 = vunpack.c.l.b16 %v54
  %v283 = vunpack.c.h.b16 %v54
  %v284 = vunpack.c.l.b16 %v55
  %v285 = vunpack.c.h.b16 %v55
  %v286 = vunpack.c.l.b16 %v56
  %v287 = vunpack.c.h.b16 %v56
  %v288 = vunpack.c.l.b16 %v57
  %v289 = vunpack.c.h.b16 %v57
  %v290 = vunpack.c.l.b16 %v58
  %v291 = vunpack.c.h.b16 %v58
  %v292 = vunpack.c.l.b16 %v59
  %v293 = vunpack.c.h.b16 %v59
  %v294 = vunpack.c.l.b16 %v60
  %v295 = vunpack.c.h.b16 %v60
  %v296 = vunpack.c.l.b16 %v61
  %v297 = vunpack.c.h.b16 %v61
  %v298 = vunpack.c.l.b16 %v62
  %v299 = vunpack.c.h.b16 %v62
  %v300 = vunpack.c.l.b16 %v63
  %v301 = vunpack.c.h.b16 %v63
  %v302 = vunpack.c.l.b16 %v64
  %v303 = vunpack.c.h.b16 %v64
  %v304 = vunpack.c.l.b16 %v65
  %v305 = vunpack.c.h.b16 %v65
  %v306 = vunpack.c.l.b16 %v66
  %v307 = vunpack.c.h.b16 %v66
  %v308 = vunpack.c.l.b16 %v67
  %v309 = vunpack.c.h.b16 %v67
  %v310 = vunpack.c.l.b16 %v68
  %v311 = vunpack.c.h.b16 %v68
  %v312 = vunpack.c.l.b16 %v69
  %v313 = vunpack.c.h.b16 %v69
  %v314 = vunpack.c.l.b16 %v70
  %v315 = vunpack.c.h.b16 %v70
  %v316 = vunpack.c.l.b16 %v71
  %v317 = vunpack.c.h.b16 %v71
  %v318 = vunpack.c.l.b16 %v72
  %v319 = vunpack.c.h.b16 %v72
  %v320 = vunpack.c.l.b16 %v73
  %v321 = vunpack.c.h.b16 %v73
  %v322 = vunpack.c.l.b16 %v74
  %v323 = vunpack.c.h.b16 %v74
  %v324 = vunpack.c.l.b16 %v75
  %v325 = vunpack.c.h.b16 %v75
  %v326 = vunpack.c.l.b16 %v76
  %v327 = vunpack.c.h.b16 %v76
  %v328 = vunpack.c.l.b16 %v77
  %v329 = vunpack.c.h.b16 %v77
  %v330 = vunpack.c.l.b16 %v78
  %v331 = vunpack.c.h.b16 %v78
  %v332 = vunpack.c.l.b16 %v79
  %v333 = vunpack.c.h.b16 %v79
  %v334 = vunpack.c.l.b16 %v80
  %v335 = vunpack.c.h.b16 %v80
  %v336 = vpack.c.b16 %v240, %v236
  %v337 = vpack.c.b16 %v241, %v237
  %v338 = vpack.c.b16 %v242, %v238
  %v339 = vpack.c.b16 %v243, %v239
  %v340 = vpack.c.b16 %v248, %v244
  %v341 = vpack.c.b16 %v249, %v245
  %v342 = vpack.c.b16 %v250, %v246
  %v343 = vpack.c.b16 %v251, %v247
  %v344 = vpack.c.b16 %v256, %v252
  %v345 = vpack.c.b16 %v257, %v253
  %v346 = vpack.c.b16 %v258, %v254
  %v347 = vpack.c.b16 %v259, %v255
  %v348 = vpack.c.b16 %v264, %v260
  %v349 = vpack.c.b16 %v265, %v261
  %v350 = vpack.c.b16 %v266, %v262
  %v351 = vpack.c.b16 %v267, %v263
  %v352 = vpack.c.b16 %v272, %v268
  %v353 = vpack.c.b16 %v273, %v269
  %v354 = vpack.c.b16 %v274, %v270
  %v355 = vpack.c.b16 %v275, %v271
  %v356 = vpack.c.b16 %v280, %v276
  %v357 = vpack.c.b16 %v281, %v277
  %v358 = vpack.c.b16 %v282, %v278
  %v359 = vpack.c.b16 %v283, %v279
  %v360 = vpack.c.b16 %v288, %v284
  %v361 = vpack.c.b16 %v289, %v285
  %v362 = vpack.c.b16 %v290, %v286
  %v363 = vpack.c.b16 %v291, %v287
  %v364 = vpack.c.b16 %v296, %v292
  %v365 = vpack.c.b16 %v297, %v293
  %v366 = vpack.c.b16 %v298, %v294
  %v367 = vpack.c.b16 %v299, %v295
  %v368 = vpack.c.b16 %v304, %v300
  %v369 = vpack.c.b16 %v305, %v301
  %v370 = vpack.c.b16 %v306, %v302
  %v371 = vpack.c.b16 %v307, %v303
  %v372 = vpack.c.b16 %v312, %v308
  %v373 = vpack.c.b16 %v313, %v309
  %v374 = vpack.c.b16 %v314, %v310
  %v375 = vpack.c.b16 %v315, %v311
  %v376 = vpack.c.b16 %v320, %v316
  %v377 = vpack.c.b16 %v321, %v317
  %v378 = vpack.c.b16 %v322, %v318
  %v379 = vpack.c.b16 %v323, %v319
  %v380 = vpack.c.b16 %v328, %v324
  %v381 = vpack.c.b16 %v329, %v325
  %v382 = vpack.c.b16 %v330, %v326
  %v383 = vpack.c.b16 %v331, %v327
  %v384 = vpack.c.b16 %v332, %v332
  %v385 = vpack.c.b16 %v333, %v333
  %v386 = vpack.c.b16 %v334, %v334
  %v387 = vpack.c.b16 %v335, %v335
  %vm436 = vcmask 588800
  %v438 = vsel %vm436, %v172, 0
  %v441 = vsel %vm436, %v174, 0
  %v444 = vsel %vm436, %v176, 0
  %v447 = vsel %vm436, %v178, 0
  %v450 = vsel %vm436, %v180, 0
  %vm452 = vcmask 1043456
  %v454 = vsel %vm452, %v384, 0
  %v457 = vsel %vm452, %v385, 0
  %v460 = vsel %vm452, %v386, 0
  %v463 = vsel %vm452, %v387, 0
  %465 = vmatprep.subr.bf16.mxu0 %v337
  %466 = vmatpush1.bf16.msra.mxu0 %v336
  %467 = vmatprep.subr.bf16.mxu0 %v341
  %468 = vmatpush1.bf16.msra.mxu0 %v340
  %469 = vmatprep.subr.bf16.mxu0 %v345
  %470 = vmatpush1.bf16.msra.mxu0 %v344
  %471 = vmatprep.subr.bf16.mxu0 %v349
  %472 = vmatpush1.bf16.msra.mxu0 %v348
  %473 = vmatprep.subr.bf16.mxu0 %v353
  %474 = vmatpush1.bf16.msra.mxu0 %v352
  %475 = vmatprep.subr.bf16.mxu0 %v357
  %476 = vmatpush1.bf16.msra.mxu0 %v356
  %477 = vmatprep.subr.bf16.mxu0 %v361
  %478 = vmatpush1.bf16.msra.mxu0 %v360
  %479 = vmatprep.subr.bf16.mxu0 %v365
  %480 = vmatpush1.bf16.msra.mxu0 %v364
  %481 = vmatprep.subr.bf16.mxu0 %v369
  %482 = vmatpush1.bf16.msra.mxu0 %v368
  %483 = vmatprep.subr.bf16.mxu0 %v373
  %484 = vmatpush1.bf16.msra.mxu0 %v372
  %485 = vmatprep.subr.bf16.mxu0 %v377
  %486 = vmatpush1.bf16.msra.mxu0 %v376
  %487 = vmatprep.subr.bf16.mxu0 %v381
  %488 = vmatpush1.bf16.msra.mxu0 %v380
  %489 = vmatprep.subr.bf16.mxu0 %v457
  %490 = vmatpush1.bf16.msra.mxu0 %v454
  %491 = vmatprep.subr.bf16.mxu0 0
  %492 = vmatpush1.bf16.msra.mxu0 0
  %493 = vmatprep.subr.bf16.mxu0 0
  %494 = vmatpush1.bf16.msra.mxu0 0
  %495 = vmatprep.subr.bf16.mxu0 0
  %496 = vmatpush1.bf16.msra.mxu0 0
  %497 = vmatprep.mubr.bf16.mxu0 %v438
  %498 = vmatmul.mubr.bf16.gmra.mrb[0].mxu0 %v171
  %v499 = vpop.f32.mrb[0].mxu0
  %v500 = vadd.f32 %v94, %v499
  %v501 = vpop.f32.mrb[0].mxu0
  %v502 = vadd.f32 %v94, %v501
  %v503 = vpop.f32.mrb[0].mxu0
  %v504 = vadd.f32 %v99, %v503
  %v505 = vpop.f32.mrb[0].mxu0
  %v506 = vadd.f32 %v99, %v505
  %507 = vmatprep.mubr.bf16.mxu0 %v441
  %508 = vmatmul.mubr.bf16.gmra.mrb[0].mxu0 %v173
  %v509 = vpop.f32.mrb[0].mxu0
  %v510 = vadd.f32 %v104, %v509
  %v511 = vpop.f32.mrb[0].mxu0
  %v512 = vadd.f32 %v104, %v511
  %v513 = vpop.f32.mrb[0].mxu0
  %v514 = vadd.f32 %v109, %v513
  %v515 = vpop.f32.mrb[0].mxu0
  %v516 = vadd.f32 %v109, %v515
  %517 = vmatprep.mubr.bf16.mxu0 %v444
  %518 = vmatmul.mubr.bf16.gmra.mrb[0].mxu0 %v175
  %v519 = vpop.f32.mrb[0].mxu0
  %v520 = vadd.f32 %v114, %v519
  %v521 = vpop.f32.mrb[0].mxu0
  %v522 = vadd.f32 %v114, %v521
  %v523 = vpop.f32.mrb[0].mxu0
  %v524 = vadd.f32 %v119, %v523
  %v525 = vpop.f32.mrb[0].mxu0
  %v526 = vadd.f32 %v119, %v525
  %527 = vmatprep.mubr.bf16.mxu0 %v447
  %528 = vmatmul.mubr.bf16.gmra.mrb[0].mxu0 %v177
  %v529 = vpop.f32.mrb[0].mxu0
  %v530 = vadd.f32 %v124, %v529
  %v531 = vpop.f32.mrb[0].mxu0
  %v532 = vadd.f32 %v124, %v531
  %v533 = vpop.f32.mrb[0].mxu0
  %v534 = vadd.f32 %v129, %v533
  %v535 = vpop.f32.mrb[0].mxu0
  %v536 = vadd.f32 %v129, %v535
  %537 = vmatprep.mubr.bf16.mxu0 %v450
  %538 = vmatmul.mubr.bf16.gmra.mrb[0].mxu0 %v179
  %v539 = vpop.f32.mrb[0].mxu0
  %v540 = vadd.f32 %v134, %v539
  %v541 = vpop.f32.mrb[0].mxu0
  %v542 = vadd.f32 %v134, %v541
  %v543 = vpop.f32.mrb[0].mxu0
  %v544 = vadd.f32 %v139, %v543
  %v545 = vpop.f32.mrb[0].mxu0
  %v546 = vadd.f32 %v139, %v545
  %547 = vdwg.mxu0
  %548 = vmatprep.subr.bf16.mxu0 %v339
  %549 = vmatpush1.bf16.msra.mxu0 %v338
  %550 = vmatprep.subr.bf16.mxu0 %v343
  %551 = vmatpush1.bf16.msra.mxu0 %v342
  %552 = vmatprep.subr.bf16.mxu0 %v347
  %553 = vmatpush1.bf16.msra.mxu0 %v346
  %554 = vmatprep.subr.bf16.mxu0 %v351
  %555 = vmatpush1.bf16.msra.mxu0 %v350
  %556 = vmatprep.subr.bf16.mxu0 %v355
  %557 = vmatpush1.bf16.msra.mxu0 %v354
  %558 = vmatprep.subr.bf16.mxu0 %v359
  %559 = vmatpush1.bf16.msra.mxu0 %v358
  %560 = vmatprep.subr.bf16.mxu0 %v363
  %561 = vmatpush1.bf16.msra.mxu0 %v362
  %562 = vmatprep.subr.bf16.mxu0 %v367
  %563 = vmatpush1.bf16.msra.mxu0 %v366
  %564 = vmatprep.subr.bf16.mxu0 %v371
  %565 = vmatpush1.bf16.msra.mxu0 %v370
  %566 = vmatprep.subr.bf16.mxu0 %v375
  %567 = vmatpush1.bf16.msra.mxu0 %v374
  %568 = vmatprep.subr.bf16.mxu0 %v379
  %569 = vmatpush1.bf16.msra.mxu0 %v378
  %570 = vmatprep.subr.bf16.mxu0 %v383
  %571 = vmatpush1.bf16.msra.mxu0 %v382
  %572 = vmatprep.subr.bf16.mxu0 %v463
  %573 = vmatpush1.bf16.msra.mxu0 %v460
  %574 = vmatprep.subr.bf16.mxu0 0
  %575 = vmatpush1.bf16.msra.mxu0 0
  %576 = vmatprep.subr.bf16.mxu0 0
  %577 = vmatpush1.bf16.msra.mxu0 0
  %578 = vmatprep.subr.bf16.mxu0 0
  %579 = vmatpush1.bf16.msra.mxu0 0
  %580 = vmatprep.mubr.bf16.mxu0 %v438
  %581 = vmatmul.mubr.bf16.gmra.mrb[0].mxu0 %v171
  %v582 = vpop.f32.mrb[0].mxu0
  %v583 = vadd.f32 %v94, %v582
  %v584 = vpop.f32.mrb[0].mxu0
  %v585 = vadd.f32 %v94, %v584
  %v586 = vpop.f32.mrb[0].mxu0
  %v587 = vadd.f32 %v99, %v586
  %v588 = vpop.f32.mrb[0].mxu0
  %v589 = vadd.f32 %v99, %v588
  %590 = vmatprep.mubr.bf16.mxu0 %v441
  %591 = vmatmul.mubr.bf16.gmra.mrb[0].mxu0 %v173
  %v592 = vpop.f32.mrb[0].mxu0
  %v593 = vadd.f32 %v104, %v592
  %v594 = vpop.f32.mrb[0].mxu0
  %v595 = vadd.f32 %v104, %v594
  %v596 = vpop.f32.mrb[0].mxu0
  %v597 = vadd.f32 %v109, %v596
  %v598 = vpop.f32.mrb[0].mxu0
  %v599 = vadd.f32 %v109, %v598
  %600 = vmatprep.mubr.bf16.mxu0 %v444
  %601 = vmatmul.mubr.bf16.gmra.mrb[0].mxu0 %v175
  %v602 = vpop.f32.mrb[0].mxu0
  %v603 = vadd.f32 %v114, %v602
  %v604 = vpop.f32.mrb[0].mxu0
  %v605 = vadd.f32 %v114, %v604
  %v606 = vpop.f32.mrb[0].mxu0
  %v607 = vadd.f32 %v119, %v606
  %v608 = vpop.f32.mrb[0].mxu0
  %v609 = vadd.f32 %v119, %v608
  %610 = vmatprep.mubr.bf16.mxu0 %v447
  %611 = vmatmul.mubr.bf16.gmra.mrb[0].mxu0 %v177
  %v612 = vpop.f32.mrb[0].mxu0
  %v613 = vadd.f32 %v124, %v612
  %v614 = vpop.f32.mrb[0].mxu0
  %v615 = vadd.f32 %v124, %v614
  %v616 = vpop.f32.mrb[0].mxu0
  %v617 = vadd.f32 %v129, %v616
  %v618 = vpop.f32.mrb[0].mxu0
  %v619 = vadd.f32 %v129, %v618
  %620 = vmatprep.mubr.bf16.mxu0 %v450
  %621 = vmatmul.mubr.bf16.gmra.mrb[0].mxu0 %v179
  %v622 = vpop.f32.mrb[0].mxu0
  %v623 = vadd.f32 %v134, %v622
  %v624 = vpop.f32.mrb[0].mxu0
  %v625 = vadd.f32 %v134, %v624
  %v626 = vpop.f32.mrb[0].mxu0
  %v627 = vadd.f32 %v139, %v626
  %v628 = vpop.f32.mrb[0].mxu0
  %v629 = vadd.f32 %v139, %v628
  %630 = vdwg.mxu0
  %v631 = vmax.f32 %v500, 0.0
  %v632 = vmax.f32 %v502, 0.0
  %v633 = vmax.f32 %v583, 0.0
  %v634 = vmax.f32 %v585, 0.0
  %v635 = vmax.f32 %v504, 0.0
  %v636 = vmax.f32 %v506, 0.0
  %v637 = vmax.f32 %v587, 0.0
  %v638 = vmax.f32 %v589, 0.0
  %v639 = vmax.f32 %v510, 0.0
  %v640 = vmax.f32 %v512, 0.0
  %v641 = vmax.f32 %v593, 0.0
  %v642 = vmax.f32 %v595, 0.0
  %v643 = vmax.f32 %v514, 0.0
  %v644 = vmax.f32 %v516, 0.0
  %v645 = vmax.f32 %v597, 0.0
  %v646 = vmax.f32 %v599, 0.0
  %v647 = vmax.f32 %v520, 0.0
  %v648 = vmax.f32 %v522, 0.0
  %v649 = vmax.f32 %v603, 0.0
  %v650 = vmax.f32 %v605, 0.0
  %v651 = vmax.f32 %v524, 0.0
  %v652 = vmax.f32 %v526, 0.0
  %v653 = vmax.f32 %v607, 0.0
  %v654 = vmax.f32 %v609, 0.0
  %v655 = vmax.f32 %v530, 0.0
  %v656 = vmax.f32 %v532, 0.0
  %v657 = vmax.f32 %v613, 0.0
  %v658 = vmax.f32 %v615, 0.0
  %v659 = vmax.f32 %v534, 0.0
  %v660 = vmax.f32 %v536, 0.0
  %v661 = vmax.f32 %v617, 0.0
  %v662 = vmax.f32 %v619, 0.0
  %v663 = vmax.f32 %v540, 0.0
  %v664 = vmax.f32 %v542, 0.0
  %v665 = vmax.f32 %v623, 0.0
  %v666 = vmax.f32 %v625, 0.0
  %v667 = vmax.f32 %v544, 0.0
  %v668 = vmax.f32 %v546, 0.0
  %v669 = vmax.f32 %v627, 0.0
  %v670 = vmax.f32 %v629, 0.0
  %v671 = vld [vmem:[%s3] sm:$0xf]
  %v672 = vld [vmem:[%s3 + $0x4] sm:$0xf]
  %v673 = vld [vmem:[%s3 + $0x8] sm:$0xf]
  %v674 = vld [vmem:[%s3 + $0xc] sm:$0xf]
  %v675 = vld [vmem:[%s3 + $0x10] sm:$0xf]
  %v676 = vpack.c.bf16 %v635, %v631
  %v677 = vpack.c.bf16 %v636, %v632
  %v678 = vpack.c.bf16 %v637, %v633
  %v679 = vpack.c.bf16 %v638, %v634
  %v680 = vpack.c.bf16 %v643, %v639
  %v681 = vpack.c.bf16 %v644, %v640
  %v682 = vpack.c.bf16 %v645, %v641
  %v683 = vpack.c.bf16 %v646, %v642
  %v684 = vpack.c.bf16 %v651, %v647
  %v685 = vpack.c.bf16 %v652, %v648
  %v686 = vpack.c.bf16 %v653, %v649
  %v687 = vpack.c.bf16 %v654, %v650
  %v688 = vpack.c.bf16 %v659, %v655
  %v689 = vpack.c.bf16 %v660, %v656
  %v690 = vpack.c.bf16 %v661, %v657
  %v691 = vpack.c.bf16 %v662, %v658
  %v692 = vpack.c.bf16 %v667, %v663
  %v693 = vpack.c.bf16 %v668, %v664
  %v694 = vpack.c.bf16 %v669, %v665
  %v695 = vpack.c.bf16 %v670, %v666
  %v701 = vunpack.c.l.b16 %v671
  %v702 = vunpack.c.l.b16 %v672
  %v703 = vunpack.c.l.b16 %v673
  %v704 = vunpack.c.l.b16 %v674
  %v705 = vunpack.c.l.b16 %v675
  %v706 = vpack.c.b16 %v702, %v701
  %v707 = vpack.c.b16 %v704, %v703
  %v708 = vpack.c.b16 %v705, %v705
  %vm709 = vcmask 654336
  %v711 = vsel %vm709, %v706, 0
  %v714 = vsel %vm709, %v707, 0
  %v717 = vsel %vm709, %v708, 0
  %719 = vmatprep.subr.bf16.mxu0 %v677
  %720 = vmatpush1.bf16.msra.mxu0 %v676
  %721 = vmatprep.subr.bf16.mxu0 %v681
  %722 = vmatpush1.bf16.msra.mxu0 %v680
  %723 = vmatprep.subr.bf16.mxu0 %v685
  %724 = vmatpush1.bf16.msra.mxu0 %v684
  %725 = vmatprep.subr.bf16.mxu0 %v689
  %726 = vmatpush1.bf16.msra.mxu0 %v688
  %727 = vmatprep.subr.bf16.mxu0 %v693
  %728 = vmatpush1.bf16.msra.mxu0 %v692
  %729 = vmatprep.subr.bf16.mxu0 0
  %730 = vmatpush1.bf16.msra.mxu0 0
  %731 = vmatprep.subr.bf16.mxu0 0
  %732 = vmatpush1.bf16.msra.mxu0 0
  %733 = vmatprep.subr.bf16.mxu0 0
  %734 = vmatpush1.bf16.msra.mxu0 0
  %735 = vmatprep.subr.bf16.mxu0 0
  %736 = vmatpush1.bf16.msra.mxu0 0
  %737 = vmatprep.subr.bf16.mxu0 0
  %738 = vmatpush1.bf16.msra.mxu0 0
  %739 = vmatprep.subr.bf16.mxu0 0
  %740 = vmatpush1.bf16.msra.mxu0 0
  %741 = vmatprep.subr.bf16.mxu0 0
  %742 = vmatpush1.bf16.msra.mxu0 0
  %743 = vmatprep.subr.bf16.mxu0 0
  %744 = vmatpush1.bf16.msra.mxu0 0
  %745 = vmatprep.subr.bf16.mxu0 0
  %746 = vmatpush1.bf16.msra.mxu0 0
  %747 = vmatprep.subr.bf16.mxu0 0
  %748 = vmatpush1.bf16.msra.mxu0 0
  %749 = vmatprep.subr.bf16.mxu0 0
  %750 = vmatpush1.bf16.msra.mxu0 0
  %751 = vmatprep.mubr.bf16.mxu0 0
  %752 = vmatmul.mubr.bf16.gmra.mrb[0].mxu0 %v711
  %v753 = vpop.f32.mrb[0].mxu0
  %v754 = vadd.f32 0.0, %v753
  %v755 = vpop.f32.mrb[0].mxu0
  %v756 = vadd.f32 0.0, %v755
  %v757 = vpop.f32.mrb[0].mxu0
  %v758 = vadd.f32 0.0, %v757
  %v759 = vpop.f32.mrb[0].mxu0
  %v760 = vadd.f32 0.0, %v759
  %761 = vmatprep.mubr.bf16.mxu0 0
  %762 = vmatmul.mubr.bf16.gmra.mrb[0].mxu0 %v714
  %v763 = vpop.f32.mrb[0].mxu0
  %v764 = vadd.f32 0.0, %v763
  %v765 = vpop.f32.mrb[0].mxu0
  %v766 = vadd.f32 0.0, %v765
  %v767 = vpop.f32.mrb[0].mxu0
  %v768 = vadd.f32 0.0, %v767
  %v769 = vpop.f32.mrb[0].mxu0
  %v770 = vadd.f32 0.0, %v769
  %771 = vmatprep.mubr.bf16.mxu0 0
  %772 = vmatmul.mubr.bf16.gmra.mrb[0].mxu0 %v717
  %v773 = vpop.f32.mrb[0].mxu0
  %v774 = vadd.f32 0.0, %v773
  %v775 = vpop.f32.mrb[0].mxu0
  %v776 = vadd.f32 0.0, %v775
  %v777 = vpop.f32.mrb[0].mxu0
  %v778 = vpop.f32.mrb[0].mxu0
  %779 = vdwg.mxu0
  %780 = vmatprep.subr.bf16.mxu0 %v679
  %781 = vmatpush1.bf16.msra.mxu0 %v678
  %782 = vmatprep.subr.bf16.mxu0 %v683
  %783 = vmatpush1.bf16.msra.mxu0 %v682
  %784 = vmatprep.subr.bf16.mxu0 %v687
  %785 = vmatpush1.bf16.msra.mxu0 %v686
  %786 = vmatprep.subr.bf16.mxu0 %v691
  %787 = vmatpush1.bf16.msra.mxu0 %v690
  %788 = vmatprep.subr.bf16.mxu0 %v695
  %789 = vmatpush1.bf16.msra.mxu0 %v694
  %790 = vmatprep.subr.bf16.mxu0 0
  %791 = vmatpush1.bf16.msra.mxu0 0
  %792 = vmatprep.subr.bf16.mxu0 0
  %793 = vmatpush1.bf16.msra.mxu0 0
  %794 = vmatprep.subr.bf16.mxu0 0
  %795 = vmatpush1.bf16.msra.mxu0 0
  %796 = vmatprep.subr.bf16.mxu0 0
  %797 = vmatpush1.bf16.msra.mxu0 0
  %798 = vmatprep.subr.bf16.mxu0 0
  %799 = vmatpush1.bf16.msra.mxu0 0
  %800 = vmatprep.subr.bf16.mxu0 0
  %801 = vmatpush1.bf16.msra.mxu0 0
  %802 = vmatprep.subr.bf16.mxu0 0
  %803 = vmatpush1.bf16.msra.mxu0 0
  %804 = vmatprep.subr.bf16.mxu0 0
  %805 = vmatpush1.bf16.msra.mxu0 0
  %806 = vmatprep.subr.bf16.mxu0 0
  %807 = vmatpush1.bf16.msra.mxu0 0
  %808 = vmatprep.subr.bf16.mxu0 0
  %809 = vmatpush1.bf16.msra.mxu0 0
  %810 = vmatprep.subr.bf16.mxu0 0
  %811 = vmatpush1.bf16.msra.mxu0 0
  %812 = vmatprep.mubr.bf16.mxu0 0
  %813 = vmatmul.mubr.bf16.gmra.mrb[0].mxu0 %v711
  %v814 = vpop.f32.mrb[0].mxu0
  %v815 = vadd.f32 0.0, %v814
  %v816 = vpop.f32.mrb[0].mxu0
  %v817 = vadd.f32 0.0, %v816
  %v818 = vpop.f32.mrb[0].mxu0
  %v819 = vadd.f32 0.0, %v818
  %v820 = vpop.f32.mrb[0].mxu0
  %v821 = vadd.f32 0.0, %v820
  %822 = vmatprep.mubr.bf16.mxu0 0
  %823 = vmatmul.mubr.bf16.gmra.mrb[0].mxu0 %v714
  %v824 = vpop.f32.mrb[0].mxu0
  %v825 = vadd.f32 0.0, %v824
  %v826 = vpop.f32.mrb[0].mxu0
  %v827 = vadd.f32 0.0, %v826
  %v828 = vpop.f32.mrb[0].mxu0
  %v829 = vadd.f32 0.0, %v828
  %v830 = vpop.f32.mrb[0].mxu0
  %v831 = vadd.f32 0.0, %v830
  %832 = vmatprep.mubr.bf16.mxu0 0
  %833 = vmatmul.mubr.bf16.gmra.mrb[0].mxu0 %v717
  %v834 = vpop.f32.mrb[0].mxu0
  %v835 = vadd.f32 0.0, %v834
  %v836 = vpop.f32.mrb[0].mxu0
  %v837 = vadd.f32 0.0, %v836
  %v838 = vpop.f32.mrb[0].mxu0
  %v839 = vpop.f32.mrb[0].mxu0
  %840 = vdwg.mxu0
  %v841 = vld [vmem:[%s1] sm:$0xff]
  %v842 = vld [vmem:[%s1 + $0x8] sm:$0xff]
  %v843 = vld [vmem:[%s1 + $0x10] sm:$0xff]
  %v844 = vld [vmem:[%s1 + $0x18] sm:$0xff]
  %v845 = vld [vmem:[%s1 + $0x20] sm:$0xff]
  %v846 = vld [vmem:[%s1 + $0x28] sm:$0xff]
  %v847 = vld [vmem:[%s1 + $0x30] sm:$0xff]
  %v848 = vld [vmem:[%s1 + $0x38] sm:$0xff]
  %v849 = vld [vmem:[%s1 + $0x40] sm:$0xff]
  %v850 = vld [vmem:[%s1 + $0x48] sm:$0xff]
  %v851 = vld [vmem:[%s1 + $0x50] sm:$0xff]
  %v852 = vld [vmem:[%s1 + $0x58] sm:$0xff]
  %v853 = vld [vmem:[%s1 + $0x60] sm:$0xff]
  %v854 = vld [vmem:[%s1 + $0x68] sm:$0xff]
  %v855 = vld [vmem:[%s1 + $0x70] sm:$0xff]
  %v856 = vld [vmem:[%s1 + $0x78] sm:$0xff]
  %v857 = vld [vmem:[%s1 + $0x80] sm:$0xff]
  %v858 = vld [vmem:[%s1 + $0x88] sm:$0xff]
  %v859 = vld [vmem:[%s1 + $0x90] sm:$0xff]
  %v860 = vld [vmem:[%s1 + $0x98] sm:$0xff]
  %v861 = vadd.f32 %v841, %v754
  %v862 = vadd.f32 %v842, %v756
  %v863 = vadd.f32 %v843, %v815
  %v864 = vadd.f32 %v844, %v817
  %v865 = vadd.f32 %v845, %v758
  %v866 = vadd.f32 %v846, %v760
  %v867 = vadd.f32 %v847, %v819
  %v868 = vadd.f32 %v848, %v821
  %v869 = vadd.f32 %v849, %v764
  %v870 = vadd.f32 %v850, %v766
  %v871 = vadd.f32 %v851, %v825
  %v872 = vadd.f32 %v852, %v827
  %v873 = vadd.f32 %v853, %v768
  %v874 = vadd.f32 %v854, %v770
  %v875 = vadd.f32 %v855, %v829
  %v876 = vadd.f32 %v856, %v831
  %v877 = vadd.f32 %v857, %v774
  %v878 = vadd.f32 %v858, %v776
  %v879 = vadd.f32 %v859, %v835
  %v880 = vadd.f32 %v860, %v837
  %881 = vst [vmem:[%s5] sm:$0xff] %v861
  %882 = vst [vmem:[%s5 + $0x8] sm:$0xff] %v862
  %883 = vst [vmem:[%s5 + $0x10] sm:$0xff] %v863
  %884 = vst [vmem:[%s5 + $0x18] sm:$0xff] %v864
  %885 = vst [vmem:[%s5 + $0x20] sm:$0xff] %v865
  %886 = vst [vmem:[%s5 + $0x28] sm:$0xff] %v866
  %887 = vst [vmem:[%s5 + $0x30] sm:$0xff] %v867
  %888 = vst [vmem:[%s5 + $0x38] sm:$0xff] %v868
  %889 = vst [vmem:[%s5 + $0x40] sm:$0xff] %v869
  %890 = vst [vmem:[%s5 + $0x48] sm:$0xff] %v870
  %891 = vst [vmem:[%s5 + $0x50] sm:$0xff] %v871
  %892 = vst [vmem:[%s5 + $0x58] sm:$0xff] %v872
  %893 = vst [vmem:[%s5 + $0x60] sm:$0xff] %v873
  %894 = vst [vmem:[%s5 + $0x68] sm:$0xff] %v874
  %895 = vst [vmem:[%s5 + $0x70] sm:$0xff] %v875
  %896 = vst [vmem:[%s5 + $0x78] sm:$0xff] %v876
  %897 = vst [vmem:[%s5 + $0x80] sm:$0xff] %v877
  %898 = vst [vmem:[%s5 + $0x88] sm:$0xff] %v878
  %899 = vst [vmem:[%s5 + $0x90] sm:$0xff] %v879
  %900 = vst [vmem:[%s5 + $0x98] sm:$0xff] %v880
  // Predicated region
  $region22: #{fasternet_block2_1.1} parent=0 // pred_check
    _
  $region23: #{fasternet_block2_1.1} parent=0 // pred_check_branch
    %902 = sbr.rel (0) target = $region25
  $region24: #{fasternet_block2_1.1} parent=0 // pred_region
    _
  $region25: #{fasternet_block2_1.1} parent=0 // pred_fallthru
    _
  // Predicated region
  $region26: #{fasternet_block2_1.1} parent=0 // pred_check
    _
  $region27: #{fasternet_block2_1.1} parent=0 // pred_check_branch
    %904 = sbr.rel (0) target = $region29
  $region28: #{fasternet_block2_1.1} parent=0 // pred_region
    _
  $region29: #{fasternet_block2_1.1} parent=0 // pred_fallthru
    _

</llo_original>
